<compile_context>
chip_gen: v6e
topology: v6e:2x2x1
jax: 0.10.0
libtpu: 0.0.40
codegen_flags: <defaults>
</compile_context>

<pallas_src>
import functools

import jax
import jax.numpy as jnp
from jax import lax
from jax.experimental import pallas as pl
from jax.experimental.pallas import tpu as pltpu

C1 = 8           # layer-1 output channels
C2 = 16          # layer-2/3 output channels
K1P = 64         # layer-1 packed contraction: 2 adjacent output cols x 32-ch im2col
K2P = 72         # layer-2 packed contraction: 3x3 taps x C1
K3P = 48         # layer-3 packed contraction per row-tap: 3 col taps x C2
S_MAX = 16       # max strip height (final-feature rows per grid step); keeps
                 # per-strip VMEM ~2.5 MB at 640x640 -> safe on v7x (64 MiB)


# ----------------------------------------------------------------------------
# Fused Pallas kernel: Conv(SiLU)x3 + 1x1 head for one (image, row-strip).
# ----------------------------------------------------------------------------
def _fused_pose_kernel(x1_ref, w1_ref, w2_ref, w3_ref, w4_ref, b_ref, o_ref,
                       act1, act2, *, H1, H2, W2, S, NOP):
    W1 = 2 * W2
    L1 = 2 * S + 5                 # layer-1 rows per strip (incl. conv halo)
    L2 = S + 2                     # layer-2 rows per strip (incl. conv halo)
    r0 = pl.program_id(1) * S      # first final-feature row of this strip

    b1 = b_ref[0:1, 0:2 * C1]
    b2 = b_ref[1:2, 0:C2]
    b3 = b_ref[2:3, 0:C2]
    b4 = b_ref[3:4, 0:NOP]

    def silu(v):   # f32 math (v5e has no bf16 VPU/EUP); divide rides the EUP
        return v * pl.reciprocal(1.0 + jnp.exp(-v), approx=True)

    # Hoisted column-validity masks.  Layers 1/2 compute a couple of extra
    # boundary columns so every slice below is a plain contiguous slice; these
    # masks zero exactly the columns that act as the convs' zero padding.
    qi = lax.broadcasted_iota(jnp.int32, (W2 + 3, 2 * C1), 0)
    li = lax.broadcasted_iota(jnp.int32, (W2 + 3, 2 * C1), 1)
    c1_col = 2 * qi - 3 + jnp.where(li >= C1, 1, 0)       # source col per lane
    edge1 = ((c1_col >= 0) & (c1_col < W1)).astype(jnp.float32)
    ci = lax.broadcasted_iota(jnp.int32, (W2 + 2, 1), 0)
    edge2 = ((ci >= 1) & (ci <= W2)).astype(jnp.float32)

    # ---- layer 1: 3x3/s2, ONE dot per row (K=54 real of 64) ----------------
    def body1(u, carry):
        r1 = 2 * r0 - 3 + u
        valid = jnp.logical_and(r1 >= 0, r1 < H1).astype(jnp.float32)
        y = jnp.dot(x1_ref[u], w1_ref[...],
                    preferred_element_type=jnp.float32)     # (W2+3, 16)
        y = silu(y + b1) * (edge1 * valid)
        act1[u] = y.astype(jnp.bfloat16)
        return carry

    lax.fori_loop(0, L1, body1, 0)

    # ---- layer 2: 3x3/s2, ONE dot per row (all 9 taps packed, K=72) --------
    def body2(v, carry):
        r2 = r0 - 1 + v
        valid = jnp.logical_and(r2 >= 0, r2 < H2).astype(jnp.float32)
        pieces = []
        for di in range(3):
            row = act1[2 * v + di]                  # (W2+3, 16)
            pieces.append(row[0:W2 + 2, :])         # taps dj=0,1 (16 lanes)
            pieces.append(row[1:W2 + 3, 0:C1])      # tap  dj=2   (8 lanes)
        lhs = jnp.concatenate(pieces, axis=-1)      # (W2+2, 72)
        y = jnp.dot(lhs, w2_ref[...], preferred_element_type=jnp.float32)
        y = silu(y + b2) * (edge2 * valid)
        act2[v] = y.astype(jnp.bfloat16)            # padded-col row, aligned
        return carry

    lax.fori_loop(0, L2, body2, 0)

    # ---- layer 3 (3 dots/row, K=48) + fused 1x1 head, per-row store ---------
    def body3(t, carry):
        def tap(di):
            row = act2[t + di]                      # (W2+2, 16)
            lhs = jnp.concatenate(
                [row[0:W2, :], row[1:W2 + 1, :], row[2:W2 + 2, :]], axis=-1)
            return jnp.dot(lhs, w3_ref[di], preferred_element_type=jnp.float32)

        y3 = silu(tap(0) + tap(1) + tap(2) + b3).astype(jnp.bfloat16)
        p = jnp.dot(y3, w4_ref[...], preferred_element_type=jnp.float32) + b4
        o_ref[t] = p                                # (W2, NOP) f32
        return carry

    lax.fori_loop(0, S, body3, 0)


# ----------------------------------------------------------------------------
# Host-side wrapper: layout plumbing + single pallas_call + tiny output slice.
# ----------------------------------------------------------------------------
@functools.partial(jax.jit, static_argnames=("H", "W", "no"))
def _autobackend_forward(im, w1p, w2p, w3p, w4p, bp, *, H, W, no):
    B = im.shape[0]
    H1, W1 = H // 2, W // 2
    H2, W2 = H // 4, W // 4
    NOP = bp.shape[1]

    # strip height over final-feature rows: largest divisor of H2 <= S_MAX
    S = min(S_MAX, H2)
    while H2 % S:
        S -= 1
    NS = H2 // S
    L1 = 2 * S + 5

    # Layer-1 im2col (layout plumbing, not compute hoisting): 27 ch -> 32,
    # column pad, then pack two adjacent layer-1 output columns per LHS row
    # so layer 1 is a single block-diagonal K=64 dot inside the kernel.
    x = jnp.transpose(im, (0, 2, 3, 1)).astype(jnp.float32)      # NHWC
    xp = jnp.pad(x, ((0, 0), (1, 1), (1, 1), (0, 0)))
    taps = [xp[:, di:di + H:2, dj:dj + W:2, :]
            for di in range(3) for dj in range(3)]
    pat = jnp.concatenate(taps, axis=-1)                         # (B,H1,W1,27)
    pat = jnp.pad(pat, ((0, 0), (0, 0), (0, 0), (0, 32 - 27)))   # K pad -> 32
    pat = jnp.pad(pat, ((0, 0), (0, 0), (3, 3), (0, 0)))         # col halo
    pat = pat.reshape(B, H1, W2 + 3, K1P)                        # col pairs

    # Overlapping row strips with the full receptive-field halo baked in
    # (zero rows outside the image); lets BlockSpec pipeline per strip.
    pat = jnp.pad(pat, ((0, 0), (3, 2), (0, 0), (0, 0)))
    strips = jnp.stack([pat[:, 2 * s * S: 2 * s * S + L1] for s in range(NS)],
                       axis=1)                                   # (B,NS,L1,W2+3,64)
    strips = strips.astype(jnp.bfloat16)

    out = pl.pallas_call(
        functools.partial(_fused_pose_kernel,
                          H1=H1, H2=H2, W2=W2, S=S, NOP=NOP),
        out_shape=jax.ShapeDtypeStruct((B, NS, S, W2, NOP), jnp.float32),
        grid_spec=pltpu.PrefetchScalarGridSpec(
            num_scalar_prefetch=0,
            grid=(B, NS),
            in_specs=[
                pl.BlockSpec((None, None, L1, W2 + 3, K1P),
                             lambda b, s: (b, s, 0, 0, 0)),
                pl.BlockSpec((K1P, 2 * C1), lambda b, s: (0, 0)),
                pl.BlockSpec((K2P, C2), lambda b, s: (0, 0)),
                pl.BlockSpec((3, K3P, C2), lambda b, s: (0, 0, 0)),
                pl.BlockSpec((C2, NOP), lambda b, s: (0, 0)),
                pl.BlockSpec((4, NOP), lambda b, s: (0, 0)),
            ],
            out_specs=pl.BlockSpec((None, None, S, W2, NOP),
                                   lambda b, s: (b, s, 0, 0, 0)),
            scratch_shapes=[
                pltpu.VMEM((L1, W2 + 3, 2 * C1), jnp.bfloat16),   # layer-1 out
                pltpu.VMEM((S + 2, W2 + 2, C2), jnp.bfloat16),    # layer-2 out
            ],
        ),
        compiler_params=pltpu.CompilerParams(
            dimension_semantics=("parallel", "parallel"),
            vmem_limit_bytes=48 * 1024 * 1024),
    )(strips, w1p, w2p, w3p, w4p, bp)

    # (B, NS, S, W2, NOP) -> (B, no, anchors); padded channels dropped.
    out = out.reshape(B, H2 * W2, NOP)
    return jnp.transpose(out[:, :, :no], (0, 2, 1))


# ----------------------------------------------------------------------------
# AutoBackend wrapper (pt backend only, like the PyTorch module)
# ----------------------------------------------------------------------------
class AutoBackendPallas:
    def __init__(self, task="pose", fp16=False, nc=1, nkpt=4, seed=0):
        self.task = task
        self.pt = True
        self.fp16 = fp16 and self.pt        # maps to bfloat16 on TPU
        self.nc = nc
        self.nkpt = nkpt
        self.no = 4 + nc + 3 * nkpt         # box(4) + cls(nc) + kpts(3*nkpt)
        self.nop = max(32, ((self.no + 31) // 32) * 32)

        # TODO(synk): torch.load/load_state_dict checkpoint loading has no
        # Pallas equivalent; parameters are initialized deterministically.
        key = jax.random.PRNGKey(seed)
        ks = jax.random.split(key, 8)

        def winit(k, shape, fan_in):
            return (jax.random.normal(k, shape, jnp.float32)
                    * (1.0 / jnp.sqrt(float(fan_in))))

        c0 = 3
        self.w1 = winit(ks[0], (3, 3, c0, C1), 9 * c0)       # stem   3x3/s2
        self.b1 = 0.01 * jax.random.normal(ks[1], (C1,), jnp.float32)
        self.w2 = winit(ks[2], (3, 3, C1, C2), 9 * C1)       # down   3x3/s2
        self.b2 = 0.01 * jax.random.normal(ks[3], (C2,), jnp.float32)
        self.w3 = winit(ks[4], (3, 3, C2, C2), 9 * C2)       # refine 3x3/s1
        self.b3 = 0.01 * jax.random.normal(ks[5], (C2,), jnp.float32)
        self.w4 = winit(ks[6], (1, 1, C2, self.no), C2)      # 1x1 pose head
        self.b4 = 0.01 * jax.random.normal(ks[7], (self.no,), jnp.float32)

        NOP = self.nop
        # layer 1: (27->32, 8) replicated block-diagonally so one dot emits
        # two adjacent output columns (the pair layout the kernel stores).
        w1f = jnp.pad(self.w1.reshape(27, C1), ((0, 32 - 27), (0, 0)))
        w1blk = jnp.zeros((K1P, 2 * C1), jnp.float32)
        w1blk = w1blk.at[0:32, 0:C1].set(w1f)
        w1blk = w1blk.at[32:64, C1:2 * C1].set(w1f)
        self.w1p = w1blk.astype(jnp.bfloat16)
        # layers 2/3: taps packed densely into the contraction dimension.
        self.w2p = self.w2.reshape(K2P, C2).astype(jnp.bfloat16)
        self.w3p = self.w3.reshape(3, K3P, C2).astype(jnp.bfloat16)
        self.w4p = jnp.pad(self.w4.reshape(C2, self.no),
                           ((0, 0), (0, NOP - self.no))).astype(jnp.bfloat16)
        b1pair = jnp.concatenate([self.b1, self.b1])
        self.bp = jnp.stack([
            jnp.pad(b1pair, (0, NOP - 2 * C1)),
            jnp.pad(self.b2, (0, NOP - C2)),
            jnp.pad(self.b3, (0, NOP - C2)),
            jnp.pad(self.b4, (0, NOP - self.no)),
        ]).astype(jnp.float32)              # (4, NOP)

    def forward(self, im):
        # im: NCHW float32 (PyTorch convention)
        b, ch, h, w = im.shape
        assert ch == 3 and h % 4 == 0 and w % 4 == 0
        if self.fp16 and im.dtype != jnp.bfloat16:
            # bf16 is the TPU-native half precision; no native fp16 path.
            im = im.astype(jnp.bfloat16)
        if self.pt:
            y = (_autobackend_forward(im, self.w1p, self.w2p, self.w3p,
                                      self.w4p, self.bp,
                                      H=h, W=w, no=self.no),)
        # from_numpy() device transfer is a no-op for JAX device arrays.
        if isinstance(y, (list, tuple)):
            return y[0] if len(y) == 1 else list(y)
        return y

    __call__ = forward

    def warmup(self, imgsz=(1, 3, 16, 16)):
        im = jnp.zeros(imgsz, jnp.bfloat16 if self.fp16 else jnp.float32)
        for _ in range(1):
            jax.block_until_ready(self.forward(im))


# ----------------------------------------------------------------------------
# Pure-JAX reference (lax.conv) with matching bf16 matmul-operand rounding
# ----------------------------------------------------------------------------
def _ref_forward(backend, im):
    dn = ("NHWC", "HWIO", "NHWC")

    def conv(x, w, b, s, act):
        y = lax.conv_general_dilated(
            x.astype(jnp.bfloat16), w.astype(jnp.bfloat16),
            window_strides=(s, s),
            padding=((w.shape[0] // 2,) * 2, (w.shape[1] // 2,) * 2),
            dimension_numbers=dn,
            preferred_element_type=jnp.float32) + b
        return y * jax.nn.sigmoid(y) if act else y

    x = jnp.transpose(im, (0, 2, 3, 1)).astype(jnp.float32)
    x = conv(x, backend.w1, backend.b1, 2, True)
    x = conv(x, backend.w2, backend.b2, 2, True)
    x = conv(x, backend.w3, backend.b3, 1, True)
    p = conv(x, backend.w4, backend.b4, 1, False)
    B, ho, wo, no = p.shape
    return jnp.transpose(p, (0, 3, 1, 2)).reshape(B, no, ho * wo)


if __name__ == "__main__":
    backend = AutoBackendPallas(task="pose", fp16=False, nc=1, nkpt=4, seed=0)

    # Small single-strip case.
    key = jax.random.PRNGKey(0)
    im = jax.random.normal(key, (2, 3, 16, 16), dtype=jnp.float32)   # NCHW
    out = jax.block_until_ready(backend(im))
    ref = jax.block_until_ready(_ref_forward(backend, im))
    assert out.shape == (2, backend.no, 4 * 4), out.shape
    err = float(jnp.max(jnp.abs(out - ref)))
    # bf16 MXU operands + EUP approx-reciprocal sigmoid -> small tolerance.
    assert err < 2e-2, f"mismatch vs reference: max abs err {err}"

    # Multi-strip case (H2=20 -> S=10, NS=2) exercising the halo/strip path.
    im2 = jax.random.normal(jax.random.PRNGKey(1), (1, 3, 80, 80), jnp.float32)
    out2 = jax.block_until_ready(backend(im2))
    ref2 = jax.block_until_ready(_ref_forward(backend, im2))
    assert out2.shape == (1, backend.no, 20 * 20), out2.shape
    err2 = float(jnp.max(jnp.abs(out2 - ref2)))
    assert err2 < 2e-2, f"mismatch vs reference (80x80): max abs err {err2}"

    print("KERNEL_OK")
</pallas_src>

<mosaic_0001>
module attributes {stable_mosaic.version = 11 : i64} {
  func.func @_fused_pose_kernel(%arg0: i32, %arg1: i32, %arg2: memref<1x1x13x7x64xbf16, #tpu.memory_space<vmem>>, %arg3: memref<64x16xbf16, #tpu.memory_space<vmem>>, %arg4: memref<72x16xbf16, #tpu.memory_space<vmem>>, %arg5: memref<3x48x16xbf16, #tpu.memory_space<vmem>>, %arg6: memref<16x32xbf16, #tpu.memory_space<vmem>>, %arg7: memref<4x32xf32, #tpu.memory_space<vmem>>, %arg8: memref<1x1x4x4x32xf32, #tpu.memory_space<vmem>>, %arg9: memref<13x7x16xbf16, #tpu.memory_space<vmem>>, %arg10: memref<6x6x16xbf16, #tpu.memory_space<vmem>>) attributes {dimension_semantics = [#tpu.dimension_semantics<parallel>, #tpu.dimension_semantics<parallel>], iteration_bounds = array<i64: 2, 1>, scalar_prefetch = 0 : i64, scratch_operands = 2 : i64, tpu.core_type = #tpu.core_type<tc>, window_params = [{transform_indices = @transform_0, window_bounds = array<i64: 1, 1, 13, 7, 64>}, {pipeline_mode = #tpu.pipeline_mode<synchronous>, transform_indices = @transform_1, window_bounds = array<i64: 64, 16>}, {pipeline_mode = #tpu.pipeline_mode<synchronous>, transform_indices = @transform_2, window_bounds = array<i64: 72, 16>}, {pipeline_mode = #tpu.pipeline_mode<synchronous>, transform_indices = @transform_3, window_bounds = array<i64: 3, 48, 16>}, {pipeline_mode = #tpu.pipeline_mode<synchronous>, transform_indices = @transform_4, window_bounds = array<i64: 16, 32>}, {pipeline_mode = #tpu.pipeline_mode<synchronous>, transform_indices = @transform_5, window_bounds = array<i64: 4, 32>}, {transform_indices = @transform_6, window_bounds = array<i64: 1, 1, 4, 4, 32>}]} {
    %c4_i32 = arith.constant 4 : i32
    %0 = arith.muli %arg1, %c4_i32 : i32
    %c0 = arith.constant 0 : index
    %c0_0 = arith.constant 0 : index
    %1 = vector.load %arg7[%c0, %c0_0] : memref<4x32xf32, #tpu.memory_space<vmem>>, vector<1x16xf32>
    %c1 = arith.constant 1 : index
    %c0_1 = arith.constant 0 : index
    %2 = vector.load %arg7[%c1, %c0_1] : memref<4x32xf32, #tpu.memory_space<vmem>>, vector<1x16xf32>
    %c2 = arith.constant 2 : index
    %c0_2 = arith.constant 0 : index
    %3 = vector.load %arg7[%c2, %c0_2] : memref<4x32xf32, #tpu.memory_space<vmem>>, vector<1x16xf32>
    %c3 = arith.constant 3 : index
    %c0_3 = arith.constant 0 : index
    %4 = vector.load %arg7[%c3, %c0_3] : memref<4x32xf32, #tpu.memory_space<vmem>>, vector<1x32xf32>
    %5 = tpu.iota {dimensions = array<i32: 0>} : vector<7x16xi32>
    %6 = tpu.iota {dimensions = array<i32: 1>} : vector<7x16xi32>
    %c2_i32 = arith.constant 2 : i32
    %7 = vector.broadcast %c2_i32 : i32 to vector<7x16xi32>
    %8 = arith.muli %7, %5 : vector<7x16xi32>
    %c3_i32 = arith.constant 3 : i32
    %9 = vector.broadcast %c3_i32 : i32 to vector<7x16xi32>
    %10 = arith.subi %8, %9 : vector<7x16xi32>
    %c8_i32 = arith.constant 8 : i32
    %11 = vector.broadcast %c8_i32 : i32 to vector<7x16xi32>
    %12 = arith.cmpi sge, %6, %11 : vector<7x16xi32>
    %c1_i32 = arith.constant 1 : i32
    %c0_i32 = arith.constant 0 : i32
    %13 = vector.broadcast %c1_i32 : i32 to vector<7x16xi32>
    %14 = vector.broadcast %c0_i32 : i32 to vector<7x16xi32>
    %15 = arith.select %12, %13, %14 : vector<7x16xi1>, vector<7x16xi32>
    %16 = arith.addi %10, %15 : vector<7x16xi32>
    %c0_i32_4 = arith.constant 0 : i32
    %17 = vector.broadcast %c0_i32_4 : i32 to vector<7x16xi32>
    %18 = arith.cmpi sge, %16, %17 : vector<7x16xi32>
    %c8_i32_5 = arith.constant 8 : i32
    %19 = vector.broadcast %c8_i32_5 : i32 to vector<7x16xi32>
    %20 = arith.cmpi slt, %16, %19 : vector<7x16xi32>
    %21 = arith.andi %18, %20 : vector<7x16xi1>
    %22 = arith.extui %21 : vector<7x16xi1> to vector<7x16xi32>
    %23 = arith.sitofp %22 : vector<7x16xi32> to vector<7x16xf32>
    %24 = tpu.iota {dimensions = array<i32: 0>} : vector<6x1xi32>
    %c1_i32_6 = arith.constant 1 : i32
    %25 = vector.broadcast %c1_i32_6 : i32 to vector<6x1xi32>
    %26 = arith.cmpi sge, %24, %25 : vector<6x1xi32>
    %c4_i32_7 = arith.constant 4 : i32
    %27 = vector.broadcast %c4_i32_7 : i32 to vector<6x1xi32>
    %28 = arith.cmpi sle, %24, %27 : vector<6x1xi32>
    %29 = arith.andi %26, %28 : vector<6x1xi1>
    %30 = arith.extui %29 : vector<6x1xi1> to vector<6x1xi32>
    %31 = arith.sitofp %30 : vector<6x1xi32> to vector<6x1xf32>
    %c0_i32_8 = arith.constant 0 : i32
    %c13_i32 = arith.constant 13 : i32
    %32 = arith.addi %c0_i32_8, %c13_i32 : i32
    %c1_i32_9 = arith.constant 1 : i32
    scf.for %arg11 = %c0_i32_8 to %32 step %c1_i32_9  : i32 {
      %c2_i32_18 = arith.constant 2 : i32
      %35 = arith.muli %c2_i32_18, %0 : i32
      %c3_i32_19 = arith.constant 3 : i32
      %36 = arith.subi %35, %c3_i32_19 : i32
      %37 = arith.addi %36, %arg11 : i32
      %c0_i32_20 = arith.constant 0 : i32
      %38 = arith.cmpi sge, %37, %c0_i32_20 : i32
      %c8_i32_21 = arith.constant 8 : i32
      %39 = arith.cmpi slt, %37, %c8_i32_21 : i32
      %40 = arith.andi %38, %39 : i1
      %41 = arith.extui %40 : i1 to i32
      %42 = arith.sitofp %41 : i32 to f32
      %c0_22 = arith.constant 0 : index
      %c0_23 = arith.constant 0 : index
      %43 = arith.index_cast %arg11 : i32 to index
      %c0_24 = arith.constant 0 : index
      %c0_25 = arith.constant 0 : index
      %44 = vector.load %arg2[%c0_22, %c0_23, %43, %c0_24, %c0_25] : memref<1x1x13x7x64xbf16, #tpu.memory_space<vmem>>, vector<1x1x1x7x64xbf16>
      %45 = vector.shape_cast %44 : vector<1x1x1x7x64xbf16> to vector<7x64xbf16>
      %c0_26 = arith.constant 0 : index
      %c0_27 = arith.constant 0 : index
      %46 = vector.load %arg3[%c0_26, %c0_27] : memref<64x16xbf16, #tpu.memory_space<vmem>>, vector<64x16xbf16>
      %cst = arith.constant dense<0.000000e+00> : vector<7x16xf32>
      %47 = tpu.matmul %45, %46, %cst {dimension_numbers = #tpu.dot_dimension_numbers<[1], [0], [0], [1], [0, 0, 1, 1], [], []>} : vector<7x64xbf16>, vector<64x16xbf16>, vector<7x16xf32> -> vector<7x16xf32>
      %48 = vector.broadcast %1 : vector<1x16xf32> to vector<7x16xf32>
      %49 = arith.addf %47, %48 : vector<7x16xf32>
      %cst_28 = arith.constant 0.000000e+00 : f32
      %50 = vector.broadcast %cst_28 : f32 to vector<7x16xf32>
      %51 = arith.subf %50, %49 : vector<7x16xf32>
      %52 = math.exp %51 : vector<7x16xf32>
      %cst_29 = arith.constant 1.000000e+00 : f32
      %53 = vector.broadcast %cst_29 : f32 to vector<7x16xf32>
      %54 = arith.addf %53, %52 : vector<7x16xf32>
      %55 = tpu.reciprocal %54 {approx = true} : vector<7x16xf32> -> vector<7x16xf32>
      %56 = arith.mulf %49, %55 : vector<7x16xf32>
      %57 = vector.broadcast %42 : f32 to vector<7x16xf32>
      %58 = arith.mulf %23, %57 : vector<7x16xf32>
      %59 = arith.mulf %56, %58 : vector<7x16xf32>
      %60 = arith.truncf %59 : vector<7x16xf32> to vector<7x16xbf16>
      %61 = arith.index_cast %arg11 : i32 to index
      %c0_30 = arith.constant 0 : index
      %c0_31 = arith.constant 0 : index
      %62 = vector.load %arg9[%61, %c0_30, %c0_31] : memref<13x7x16xbf16, #tpu.memory_space<vmem>>, vector<1x7x16xbf16>
      %63 = vector.shape_cast %62 : vector<1x7x16xbf16> to vector<7x16xbf16>
      %64 = vector.shape_cast %60 : vector<7x16xbf16> to vector<1x7x16xbf16>
      tpu.vector_store %arg9[%61, %c0_30, %c0_31], %64 {strides = array<i32>} : memref<13x7x16xbf16, #tpu.memory_space<vmem>>, vector<1x7x16xbf16>,
    }
    %c13_i32_10 = arith.constant 13 : i32
    %c0_i32_11 = arith.constant 0 : i32
    %c6_i32 = arith.constant 6 : i32
    %33 = arith.addi %c0_i32_11, %c6_i32 : i32
    %c1_i32_12 = arith.constant 1 : i32
    scf.for %arg11 = %c0_i32_11 to %33 step %c1_i32_12  : i32 {
      %c1_i32_18 = arith.constant 1 : i32
      %35 = arith.subi %0, %c1_i32_18 : i32
      %36 = arith.addi %35, %arg11 : i32
      %c0_i32_19 = arith.constant 0 : i32
      %37 = arith.cmpi sge, %36, %c0_i32_19 : i32
      %c4_i32_20 = arith.constant 4 : i32
      %38 = arith.cmpi slt, %36, %c4_i32_20 : i32
      %39 = arith.andi %37, %38 : i1
      %40 = arith.extui %39 : i1 to i32
      %41 = arith.sitofp %40 : i32 to f32
      %c2_i32_21 = arith.constant 2 : i32
      %42 = arith.muli %c2_i32_21, %arg11 : i32
      %c0_i32_22 = arith.constant 0 : i32
      %43 = arith.addi %42, %c0_i32_22 : i32
      %44 = arith.index_cast %43 : i32 to index
      %c0_23 = arith.constant 0 : index
      %c0_24 = arith.constant 0 : index
      %45 = vector.load %arg9[%44, %c0_23, %c0_24] : memref<13x7x16xbf16, #tpu.memory_space<vmem>>, vector<1x7x16xbf16>
      %46 = vector.shape_cast %45 : vector<1x7x16xbf16> to vector<7x16xbf16>
      %47 = vector.extract_strided_slice %46 {offsets = [0, 0], sizes = [6, 16], strides = [1, 1]} : vector<7x16xbf16> to vector<6x16xbf16>
      %48 = vector.extract_strided_slice %46 {offsets = [1, 0], sizes = [6, 8], strides = [1, 1]} : vector<7x16xbf16> to vector<6x8xbf16>
      %c2_i32_25 = arith.constant 2 : i32
      %49 = arith.muli %c2_i32_25, %arg11 : i32
      %c1_i32_26 = arith.constant 1 : i32
      %50 = arith.addi %49, %c1_i32_26 : i32
      %51 = arith.index_cast %50 : i32 to index
      %c0_27 = arith.constant 0 : index
      %c0_28 = arith.constant 0 : index
      %52 = vector.load %arg9[%51, %c0_27, %c0_28] : memref<13x7x16xbf16, #tpu.memory_space<vmem>>, vector<1x7x16xbf16>
      %53 = vector.shape_cast %52 : vector<1x7x16xbf16> to vector<7x16xbf16>
      %54 = vector.extract_strided_slice %53 {offsets = [0, 0], sizes = [6, 16], strides = [1, 1]} : vector<7x16xbf16> to vector<6x16xbf16>
      %55 = vector.extract_strided_slice %53 {offsets = [1, 0], sizes = [6, 8], strides = [1, 1]} : vector<7x16xbf16> to vector<6x8xbf16>
      %c2_i32_29 = arith.constant 2 : i32
      %56 = arith.muli %c2_i32_29, %arg11 : i32
      %c2_i32_30 = arith.constant 2 : i32
      %57 = arith.addi %56, %c2_i32_30 : i32
      %58 = arith.index_cast %57 : i32 to index
      %c0_31 = arith.constant 0 : index
      %c0_32 = arith.constant 0 : index
      %59 = vector.load %arg9[%58, %c0_31, %c0_32] : memref<13x7x16xbf16, #tpu.memory_space<vmem>>, vector<1x7x16xbf16>
      %60 = vector.shape_cast %59 : vector<1x7x16xbf16> to vector<7x16xbf16>
      %61 = vector.extract_strided_slice %60 {offsets = [0, 0], sizes = [6, 16], strides = [1, 1]} : vector<7x16xbf16> to vector<6x16xbf16>
      %62 = vector.extract_strided_slice %60 {offsets = [1, 0], sizes = [6, 8], strides = [1, 1]} : vector<7x16xbf16> to vector<6x8xbf16>
      %63 = tpu.concatenate %47, %48, %54, %55, %61, %62 in 1 : vector<6x16xbf16>, vector<6x8xbf16>, vector<6x16xbf16>, vector<6x8xbf16>, vector<6x16xbf16>, vector<6x8xbf16> -> vector<6x72xbf16>
      %c0_33 = arith.constant 0 : index
      %c0_34 = arith.constant 0 : index
      %64 = vector.load %arg4[%c0_33, %c0_34] : memref<72x16xbf16, #tpu.memory_space<vmem>>, vector<72x16xbf16>
      %cst = arith.constant dense<0.000000e+00> : vector<6x16xf32>
      %65 = tpu.matmul %63, %64, %cst {dimension_numbers = #tpu.dot_dimension_numbers<[1], [0], [0], [1], [0, 0, 1, 1], [], []>} : vector<6x72xbf16>, vector<72x16xbf16>, vector<6x16xf32> -> vector<6x16xf32>
      %66 = vector.broadcast %2 : vector<1x16xf32> to vector<6x16xf32>
      %67 = arith.addf %65, %66 : vector<6x16xf32>
      %cst_35 = arith.constant 0.000000e+00 : f32
      %68 = vector.broadcast %cst_35 : f32 to vector<6x16xf32>
      %69 = arith.subf %68, %67 : vector<6x16xf32>
      %70 = math.exp %69 : vector<6x16xf32>
      %cst_36 = arith.constant 1.000000e+00 : f32
      %71 = vector.broadcast %cst_36 : f32 to vector<6x16xf32>
      %72 = arith.addf %71, %70 : vector<6x16xf32>
      %73 = tpu.reciprocal %72 {approx = true} : vector<6x16xf32> -> vector<6x16xf32>
      %74 = arith.mulf %67, %73 : vector<6x16xf32>
      %75 = vector.broadcast %41 : f32 to vector<6x1xf32>
      %76 = arith.mulf %31, %75 : vector<6x1xf32>
      %77 = vector.broadcast %76 : vector<6x1xf32> to vector<6x16xf32>
      %78 = arith.mulf %74, %77 : vector<6x16xf32>
      %79 = arith.truncf %78 : vector<6x16xf32> to vector<6x16xbf16>
      %80 = arith.index_cast %arg11 : i32 to index
      %c0_37 = arith.constant 0 : index
      %c0_38 = arith.constant 0 : index
      %81 = vector.load %arg10[%80, %c0_37, %c0_38] : memref<6x6x16xbf16, #tpu.memory_space<vmem>>, vector<1x6x16xbf16>
      %82 = vector.shape_cast %81 : vector<1x6x16xbf16> to vector<6x16xbf16>
      %83 = vector.shape_cast %79 : vector<6x16xbf16> to vector<1x6x16xbf16>
      tpu.vector_store %arg10[%80, %c0_37, %c0_38], %83 {strides = array<i32>} : memref<6x6x16xbf16, #tpu.memory_space<vmem>>, vector<1x6x16xbf16>,
    }
    %c6_i32_13 = arith.constant 6 : i32
    %c0_i32_14 = arith.constant 0 : i32
    %c4_i32_15 = arith.constant 4 : i32
    %34 = arith.addi %c0_i32_14, %c4_i32_15 : i32
    %c1_i32_16 = arith.constant 1 : i32
    scf.for %arg11 = %c0_i32_14 to %34 step %c1_i32_16  : i32 {
      %c0_i32_18 = arith.constant 0 : i32
      %35 = arith.addi %arg11, %c0_i32_18 : i32
      %36 = arith.index_cast %35 : i32 to index
      %c0_19 = arith.constant 0 : index
      %c0_20 = arith.constant 0 : index
      %37 = vector.load %arg10[%36, %c0_19, %c0_20] : memref<6x6x16xbf16, #tpu.memory_space<vmem>>, vector<1x6x16xbf16>
      %38 = vector.shape_cast %37 : vector<1x6x16xbf16> to vector<6x16xbf16>
      %39 = vector.extract_strided_slice %38 {offsets = [0, 0], sizes = [4, 16], strides = [1, 1]} : vector<6x16xbf16> to vector<4x16xbf16>
      %40 = vector.extract_strided_slice %38 {offsets = [1, 0], sizes = [4, 16], strides = [1, 1]} : vector<6x16xbf16> to vector<4x16xbf16>
      %41 = vector.extract_strided_slice %38 {offsets = [2, 0], sizes = [4, 16], strides = [1, 1]} : vector<6x16xbf16> to vector<4x16xbf16>
      %42 = tpu.concatenate %39, %40, %41 in 1 : vector<4x16xbf16>, vector<4x16xbf16>, vector<4x16xbf16> -> vector<4x48xbf16>
      %c0_21 = arith.constant 0 : index
      %c0_22 = arith.constant 0 : index
      %c0_23 = arith.constant 0 : index
      %43 = vector.load %arg5[%c0_21, %c0_22, %c0_23] : memref<3x48x16xbf16, #tpu.memory_space<vmem>>, vector<1x48x16xbf16>
      %44 = vector.shape_cast %43 : vector<1x48x16xbf16> to vector<48x16xbf16>
      %cst = arith.constant dense<0.000000e+00> : vector<4x16xf32>
      %45 = tpu.matmul %42, %44, %cst {dimension_numbers = #tpu.dot_dimension_numbers<[1], [0], [0], [1], [0, 0, 1, 1], [], []>} : vector<4x48xbf16>, vector<48x16xbf16>, vector<4x16xf32> -> vector<4x16xf32>
      %c1_i32_24 = arith.constant 1 : i32
      %46 = arith.addi %arg11, %c1_i32_24 : i32
      %47 = arith.index_cast %46 : i32 to index
      %c0_25 = arith.constant 0 : index
      %c0_26 = arith.constant 0 : index
      %48 = vector.load %arg10[%47, %c0_25, %c0_26] : memref<6x6x16xbf16, #tpu.memory_space<vmem>>, vector<1x6x16xbf16>
      %49 = vector.shape_cast %48 : vector<1x6x16xbf16> to vector<6x16xbf16>
      %50 = vector.extract_strided_slice %49 {offsets = [0, 0], sizes = [4, 16], strides = [1, 1]} : vector<6x16xbf16> to vector<4x16xbf16>
      %51 = vector.extract_strided_slice %49 {offsets = [1, 0], sizes = [4, 16], strides = [1, 1]} : vector<6x16xbf16> to vector<4x16xbf16>
      %52 = vector.extract_strided_slice %49 {offsets = [2, 0], sizes = [4, 16], strides = [1, 1]} : vector<6x16xbf16> to vector<4x16xbf16>
      %53 = tpu.concatenate %50, %51, %52 in 1 : vector<4x16xbf16>, vector<4x16xbf16>, vector<4x16xbf16> -> vector<4x48xbf16>
      %c1_27 = arith.constant 1 : index
      %c0_28 = arith.constant 0 : index
      %c0_29 = arith.constant 0 : index
      %54 = vector.load %arg5[%c1_27, %c0_28, %c0_29] : memref<3x48x16xbf16, #tpu.memory_space<vmem>>, vector<1x48x16xbf16>
      %55 = vector.shape_cast %54 : vector<1x48x16xbf16> to vector<48x16xbf16>
      %cst_30 = arith.constant dense<0.000000e+00> : vector<4x16xf32>
      %56 = tpu.matmul %53, %55, %cst_30 {dimension_numbers = #tpu.dot_dimension_numbers<[1], [0], [0], [1], [0, 0, 1, 1], [], []>} : vector<4x48xbf16>, vector<48x16xbf16>, vector<4x16xf32> -> vector<4x16xf32>
      %57 = arith.addf %45, %56 : vector<4x16xf32>
      %c2_i32_31 = arith.constant 2 : i32
      %58 = arith.addi %arg11, %c2_i32_31 : i32
      %59 = arith.index_cast %58 : i32 to index
      %c0_32 = arith.constant 0 : index
      %c0_33 = arith.constant 0 : index
      %60 = vector.load %arg10[%59, %c0_32, %c0_33] : memref<6x6x16xbf16, #tpu.memory_space<vmem>>, vector<1x6x16xbf16>
      %61 = vector.shape_cast %60 : vector<1x6x16xbf16> to vector<6x16xbf16>
      %62 = vector.extract_strided_slice %61 {offsets = [0, 0], sizes = [4, 16], strides = [1, 1]} : vector<6x16xbf16> to vector<4x16xbf16>
      %63 = vector.extract_strided_slice %61 {offsets = [1, 0], sizes = [4, 16], strides = [1, 1]} : vector<6x16xbf16> to vector<4x16xbf16>
      %64 = vector.extract_strided_slice %61 {offsets = [2, 0], sizes = [4, 16], strides = [1, 1]} : vector<6x16xbf16> to vector<4x16xbf16>
      %65 = tpu.concatenate %62, %63, %64 in 1 : vector<4x16xbf16>, vector<4x16xbf16>, vector<4x16xbf16> -> vector<4x48xbf16>
      %c2_34 = arith.constant 2 : index
      %c0_35 = arith.constant 0 : index
      %c0_36 = arith.constant 0 : index
      %66 = vector.load %arg5[%c2_34, %c0_35, %c0_36] : memref<3x48x16xbf16, #tpu.memory_space<vmem>>, vector<1x48x16xbf16>
      %67 = vector.shape_cast %66 : vector<1x48x16xbf16> to vector<48x16xbf16>
      %cst_37 = arith.constant dense<0.000000e+00> : vector<4x16xf32>
      %68 = tpu.matmul %65, %67, %cst_37 {dimension_numbers = #tpu.dot_dimension_numbers<[1], [0], [0], [1], [0, 0, 1, 1], [], []>} : vector<4x48xbf16>, vector<48x16xbf16>, vector<4x16xf32> -> vector<4x16xf32>
      %69 = arith.addf %57, %68 : vector<4x16xf32>
      %70 = vector.broadcast %3 : vector<1x16xf32> to vector<4x16xf32>
      %71 = arith.addf %69, %70 : vector<4x16xf32>
      %cst_38 = arith.constant 0.000000e+00 : f32
      %72 = vector.broadcast %cst_38 : f32 to vector<4x16xf32>
      %73 = arith.subf %72, %71 : vector<4x16xf32>
      %74 = math.exp %73 : vector<4x16xf32>
      %cst_39 = arith.constant 1.000000e+00 : f32
      %75 = vector.broadcast %cst_39 : f32 to vector<4x16xf32>
      %76 = arith.addf %75, %74 : vector<4x16xf32>
      %77 = tpu.reciprocal %76 {approx = true} : vector<4x16xf32> -> vector<4x16xf32>
      %78 = arith.mulf %71, %77 : vector<4x16xf32>
      %79 = arith.truncf %78 : vector<4x16xf32> to vector<4x16xbf16>
      %c0_40 = arith.constant 0 : index
      %c0_41 = arith.constant 0 : index
      %80 = vector.load %arg6[%c0_40, %c0_41] : memref<16x32xbf16, #tpu.memory_space<vmem>>, vector<16x32xbf16>
      %cst_42 = arith.constant dense<0.000000e+00> : vector<4x32xf32>
      %81 = tpu.matmul %79, %80, %cst_42 {dimension_numbers = #tpu.dot_dimension_numbers<[1], [0], [0], [1], [0, 0, 1, 1], [], []>} : vector<4x16xbf16>, vector<16x32xbf16>, vector<4x32xf32> -> vector<4x32xf32>
      %82 = vector.broadcast %4 : vector<1x32xf32> to vector<4x32xf32>
      %83 = arith.addf %81, %82 : vector<4x32xf32>
      %c0_43 = arith.constant 0 : index
      %c0_44 = arith.constant 0 : index
      %84 = arith.index_cast %arg11 : i32 to index
      %c0_45 = arith.constant 0 : index
      %c0_46 = arith.constant 0 : index
      %85 = vector.load %arg8[%c0_43, %c0_44, %84, %c0_45, %c0_46] : memref<1x1x4x4x32xf32, #tpu.memory_space<vmem>>, vector<1x1x1x4x32xf32>
      %86 = vector.shape_cast %85 : vector<1x1x1x4x32xf32> to vector<4x32xf32>
      %87 = vector.shape_cast %83 : vector<4x32xf32> to vector<1x1x1x4x32xf32>
      tpu.vector_store %arg8[%c0_43, %c0_44, %84, %c0_45, %c0_46], %87 {strides = array<i32>} : memref<1x1x4x4x32xf32, #tpu.memory_space<vmem>>, vector<1x1x1x4x32xf32>,
    }
    %c4_i32_17 = arith.constant 4 : i32
    return
  }
  func.func @transform_0(%arg0: i32, %arg1: i32) -> (i32, i32, i32, i32, i32) {
    %c0_i32 = arith.constant 0 : i32
    %c0_i32_0 = arith.constant 0 : i32
    %c0_i32_1 = arith.constant 0 : i32
    %c0_i32_2 = arith.constant 0 : i32
    return %arg0, %arg1, %c0_i32, %c0_i32_0, %c0_i32_1 : i32, i32, i32, i32, i32
  }
  func.func @transform_1(%arg0: i32, %arg1: i32) -> (i32, i32) {
    %c0_i32 = arith.constant 0 : i32
    %c0_i32_0 = arith.constant 0 : i32
    %c0_i32_1 = arith.constant 0 : i32
    return %c0_i32, %c0_i32_0 : i32, i32
  }
  func.func @transform_2(%arg0: i32, %arg1: i32) -> (i32, i32) {
    %c0_i32 = arith.constant 0 : i32
    %c0_i32_0 = arith.constant 0 : i32
    %c0_i32_1 = arith.constant 0 : i32
    return %c0_i32, %c0_i32_0 : i32, i32
  }
  func.func @transform_3(%arg0: i32, %arg1: i32) -> (i32, i32, i32) {
    %c0_i32 = arith.constant 0 : i32
    %c0_i32_0 = arith.constant 0 : i32
    %c0_i32_1 = arith.constant 0 : i32
    %c0_i32_2 = arith.constant 0 : i32
    return %c0_i32, %c0_i32_0, %c0_i32_1 : i32, i32, i32
  }
  func.func @transform_4(%arg0: i32, %arg1: i32) -> (i32, i32) {
    %c0_i32 = arith.constant 0 : i32
    %c0_i32_0 = arith.constant 0 : i32
    %c0_i32_1 = arith.constant 0 : i32
    return %c0_i32, %c0_i32_0 : i32, i32
  }
  func.func @transform_5(%arg0: i32, %arg1: i32) -> (i32, i32) {
    %c0_i32 = arith.constant 0 : i32
    %c0_i32_0 = arith.constant 0 : i32
    %c0_i32_1 = arith.constant 0 : i32
    return %c0_i32, %c0_i32_0 : i32, i32
  }
  func.func @transform_6(%arg0: i32, %arg1: i32) -> (i32, i32, i32, i32, i32) {
    %c0_i32 = arith.constant 0 : i32
    %c0_i32_0 = arith.constant 0 : i32
    %c0_i32_1 = arith.constant 0 : i32
    %c0_i32_2 = arith.constant 0 : i32
    return %arg0, %arg1, %c0_i32, %c0_i32_0, %c0_i32_1 : i32, i32, i32, i32, i32
  }
}

</mosaic_0001>

<llo_original>
// kernel: _autobackend_forward.1
$region0: #{_autobackend_forward.1}
  #allocation0 [shape = 'u32[]', space=smem, size = 0x4, offset = 0x4, fixed_abs, tag = 'smem constant byte address 0x4 - core index']
  #allocation1 [shape = 'u32[144,128]{1,0:T(1,128)}', space=vmem, size = 0x12000, scoped, tag = 'internal scratch']
  #allocation2 [shape = 'bf16[13,7,16]{2,1,0:T(8,128)(2,1)}', space=vmem, size = 0x6800, scoped, tag = 'scratch operand']
  #allocation3 [shape = 'bf16[6,6,16]{2,1,0:T(8,128)(2,1)}', space=vmem, size = 0x3000, scoped, tag = 'scratch operand']
  %s0 = inlined_call_operand.vmem [shape: bf16[2,1,13,7,64], index: 0, kind: input, shape index: {}]
  %s1 = inlined_call_operand.vmem [shape: bf16[64,16], index: 1, kind: input, shape index: {}]
  %s2 = inlined_call_operand.vmem [shape: bf16[72,16], index: 2, kind: input, shape index: {}]
  %s3 = inlined_call_operand.vmem [shape: bf16[3,48,16], index: 3, kind: input, shape index: {}]
  %s4 = inlined_call_operand.vmem [shape: bf16[16,32], index: 4, kind: input, shape index: {}]
  %s5 = inlined_call_operand.vmem [shape: f32[4,32], index: 5, kind: input, shape index: {}]
  %s6 = inlined_call_operand.vmem [shape: f32[2,1,4,4,32], index: 6, kind: output, shape index: {}]
  %s7 = sld [smem:[#allocation0]]
  $region78: #{_autobackend_forward.1} parent=0
    _
  %s9 = ssub.s32 1, %s7
  %s10 = scalar_select 0, %s9, %s7
  loop: start=0, step=1, limit=4
  $region2: #{_autobackend_forward.1} parent=0 // loop_pre_header
    _
  $region3: #{_autobackend_forward.1} parent=0 // loop_header
    %s12 = sphi 0, %s16
    %p13 = scmp.ge.s32.totalorder %s12, 4
    %s19 = sphi 0, %s31
    %s20 = sphi 0, %s27
    %s21 = sphi 0, %s19
    %s22 = sphi 0, %s20
    %s23 = sphi 0, %s21
    %s24 = sphi 0, %s22
    %s36 = sphi 0, %s38
    %s39 = sphi 0, %s36
    %s40 = sphi 0, %s39
    %s56 = sphi 0, %s40
    %s60 = sphi 0, %s60
    %s62 = sphi 0, %s60
    %s63 = sphi 0, %s62
    %s77 = sphi 0, %s63
    %s81 = sphi 0, %s81
    %s83 = sphi 0, %s81
    %s84 = sphi 0, %s83
    %s98 = sphi 0, %s84
    %s102 = sphi 0, %s102
    %s104 = sphi 0, %s102
    %s105 = sphi 0, %s104
    %s119 = sphi 0, %s105
    %s123 = sphi 0, %s123
    %s125 = sphi 0, %s123
    %s126 = sphi 0, %s125
    %s140 = sphi 0, %s126
    %s144 = sphi 0, %s144
    %s146 = sphi 0, %s144
    %s147 = sphi 0, %s146
    %s161 = sphi 0, %s147
    %s169 = sphi 0, %s171
    %s172 = sphi 0, %s169
    %s173 = sphi 0, %s172
    %s189 = sphi 0, %s173
  $region4: #{_autobackend_forward.1} parent=0 // loop_header_branch
    %15 = sbr.rel (%p13) target = $region8
  $region5: #{_autobackend_forward.1} parent=0 // loop_body
    %s17 = ssub.s32 %s12, 1
    %s18 = ssub.s32 %s12, 2
    %s25 = sadd.s32 1, %s20
    %p26 = scmp.ge.s32.totalorder %s25, 1
    %s27 = scalar_select %p26, 0, %s25
    %s28 = sadd.s32 1, %s19
    %s29 = scalar_select %p26, %s28, %s19
    %p30 = scmp.ge.s32.totalorder %s29, 2
    %s31 = scalar_select %p30, 0, %s29
    %s32 = ssub.s32 %s19, %s31
    %s33 = ssub.s32 %s20, %s27
    %s34 = sor.u32 %s32, %s33
    %p35 = scmp.eq.s32.totalorder %s34, 0
    %s37 = sadd.s32 %s36, 1
    %s38 = scalar_select %p35, %s36, %s37
    %p41 = pneg %p35
    %p42 = scmp.eq.s32.totalorder %s12, 1
    %p43 = por %p41, %p42
    %p44 = scmp.ne.s32.totalorder %s36, %s39
    %p45 = scmp.eq.s32.totalorder %s12, 0
    %p46 = por %p44, %p45
    %p47 = scmp.ne.s32.totalorder %s36, %s39
    %p48 = scmp.eq.s32.totalorder %s17, 1
    %p49 = por %p47, %p48
    %p50 = scmp.ne.s32.totalorder %s39, %s40
    %p51 = scmp.eq.s32.totalorder %s17, 0
    %p52 = por %p50, %p51
    %p53 = scmp.ne.s32.totalorder %s39, %s40
    %p54 = scmp.eq.s32.totalorder %s18, 1
    %p55 = por %p53, %p54
    %p57 = scmp.ne.s32.totalorder %s40, %s56
    %p58 = scmp.eq.s32.totalorder %s18, 0
    %p59 = por %p57, %p58
    %s61 = sadd.s32 %s60, 1
    %p64 = scmp.eq.s32.totalorder %s12, 1
    %p65 = scmp.ne.s32.totalorder %s60, %s62
    %p66 = scmp.eq.s32.totalorder %s12, 0
    %p67 = por %p65, %p66
    %p68 = scmp.ne.s32.totalorder %s60, %s62
    %p69 = scmp.eq.s32.totalorder %s17, 1
    %p70 = por %p68, %p69
    %p71 = scmp.ne.s32.totalorder %s62, %s63
    %p72 = scmp.eq.s32.totalorder %s17, 0
    %p73 = por %p71, %p72
    %p74 = scmp.ne.s32.totalorder %s62, %s63
    %p75 = scmp.eq.s32.totalorder %s18, 1
    %p76 = por %p74, %p75
    %p78 = scmp.ne.s32.totalorder %s63, %s77
    %p79 = scmp.eq.s32.totalorder %s18, 0
    %p80 = por %p78, %p79
    %s82 = sadd.s32 %s81, 1
    %p85 = scmp.eq.s32.totalorder %s12, 1
    %p86 = scmp.ne.s32.totalorder %s81, %s83
    %p87 = scmp.eq.s32.totalorder %s12, 0
    %p88 = por %p86, %p87
    %p89 = scmp.ne.s32.totalorder %s81, %s83
    %p90 = scmp.eq.s32.totalorder %s17, 1
    %p91 = por %p89, %p90
    %p92 = scmp.ne.s32.totalorder %s83, %s84
    %p93 = scmp.eq.s32.totalorder %s17, 0
    %p94 = por %p92, %p93
    %p95 = scmp.ne.s32.totalorder %s83, %s84
    %p96 = scmp.eq.s32.totalorder %s18, 1
    %p97 = por %p95, %p96
    %p99 = scmp.ne.s32.totalorder %s84, %s98
    %p100 = scmp.eq.s32.totalorder %s18, 0
    %p101 = por %p99, %p100
    %s103 = sadd.s32 %s102, 1
    %p106 = scmp.eq.s32.totalorder %s12, 1
    %p107 = scmp.ne.s32.totalorder %s102, %s104
    %p108 = scmp.eq.s32.totalorder %s12, 0
    %p109 = por %p107, %p108
    %p110 = scmp.ne.s32.totalorder %s102, %s104
    %p111 = scmp.eq.s32.totalorder %s17, 1
    %p112 = por %p110, %p111
    %p113 = scmp.ne.s32.totalorder %s104, %s105
    %p114 = scmp.eq.s32.totalorder %s17, 0
    %p115 = por %p113, %p114
    %p116 = scmp.ne.s32.totalorder %s104, %s105
    %p117 = scmp.eq.s32.totalorder %s18, 1
    %p118 = por %p116, %p117
    %p120 = scmp.ne.s32.totalorder %s105, %s119
    %p121 = scmp.eq.s32.totalorder %s18, 0
    %p122 = por %p120, %p121
    %s124 = sadd.s32 %s123, 1
    %p127 = scmp.eq.s32.totalorder %s12, 1
    %p128 = scmp.ne.s32.totalorder %s123, %s125
    %p129 = scmp.eq.s32.totalorder %s12, 0
    %p130 = por %p128, %p129
    %p131 = scmp.ne.s32.totalorder %s123, %s125
    %p132 = scmp.eq.s32.totalorder %s17, 1
    %p133 = por %p131, %p132
    %p134 = scmp.ne.s32.totalorder %s125, %s126
    %p135 = scmp.eq.s32.totalorder %s17, 0
    %p136 = por %p134, %p135
    %p137 = scmp.ne.s32.totalorder %s125, %s126
    %p138 = scmp.eq.s32.totalorder %s18, 1
    %p139 = por %p137, %p138
    %p141 = scmp.ne.s32.totalorder %s126, %s140
    %p142 = scmp.eq.s32.totalorder %s18, 0
    %p143 = por %p141, %p142
    %s145 = sadd.s32 %s144, 1
    %p148 = scmp.eq.s32.totalorder %s12, 1
    %p149 = scmp.ne.s32.totalorder %s144, %s146
    %p150 = scmp.eq.s32.totalorder %s12, 0
    %p151 = por %p149, %p150
    %p152 = scmp.ne.s32.totalorder %s144, %s146
    %p153 = scmp.eq.s32.totalorder %s17, 1
    %p154 = por %p152, %p153
    %p155 = scmp.ne.s32.totalorder %s146, %s147
    %p156 = scmp.eq.s32.totalorder %s17, 0
    %p157 = por %p155, %p156
    %p158 = scmp.ne.s32.totalorder %s146, %s147
    %p159 = scmp.eq.s32.totalorder %s18, 1
    %p160 = por %p158, %p159
    %p162 = scmp.ne.s32.totalorder %s147, %s161
    %p163 = scmp.eq.s32.totalorder %s18, 0
    %p164 = por %p162, %p163
    %s165 = ssub.s32 %s19, %s31
    %s166 = ssub.s32 %s20, %s27
    %s167 = sor.u32 %s165, %s166
    %p168 = scmp.eq.s32.totalorder %s167, 0
    %s170 = sadd.s32 %s169, 1
    %s171 = scalar_select %p168, %s169, %s170
    %p174 = pneg %p168
    %p175 = scmp.eq.s32.totalorder %s12, 1
    %p176 = por %p174, %p175
    %p177 = scmp.ne.s32.totalorder %s169, %s172
    %p178 = scmp.eq.s32.totalorder %s12, 0
    %p179 = por %p177, %p178
    %p180 = scmp.ne.s32.totalorder %s169, %s172
    %p181 = scmp.eq.s32.totalorder %s17, 1
    %p182 = por %p180, %p181
    %p183 = scmp.ne.s32.totalorder %s172, %s173
    %p184 = scmp.eq.s32.totalorder %s17, 0
    %p185 = por %p183, %p184
    %p186 = scmp.ne.s32.totalorder %s172, %s173
    %p187 = scmp.eq.s32.totalorder %s18, 1
    %p188 = por %p186, %p187
    %p190 = scmp.ne.s32.totalorder %s173, %s189
    %p191 = scmp.eq.s32.totalorder %s18, 0
    %p192 = por %p190, %p191
    %p193 = scmp.le.s32.totalorder 1, %s12
    %p194 = scmp.lt.s32.totalorder %s12, 3
    %p195 = pnand %p193, %p194
    %p196 = pneg %p195
    // Predicated region
    $region9: #{_autobackend_forward.1} parent=5 // pred_check
      _
    $region10: #{_autobackend_forward.1} parent=5 // pred_check_branch
      %198 = sbr.rel (%p195) target = $region12
    $region11: #{_autobackend_forward.1} parent=5 // pred_region
      %s199 = ssub.s32 %s12, 1
      // Predicated region
      $region13: #{_autobackend_forward.1} parent=11 // pred_check
        %p200 = pneg %p73
      $region14: #{_autobackend_forward.1} parent=11 // pred_check_branch
        %202 = sbr.rel (%p200) target = $region16
      $region15: #{_autobackend_forward.1} parent=11 // pred_region
        _
      $region16: #{_autobackend_forward.1} parent=11 // pred_fallthru
        _
      // Predicated region
      $region17: #{_autobackend_forward.1} parent=11 // pred_check
        %p203 = pneg %p94
      $region18: #{_autobackend_forward.1} parent=11 // pred_check_branch
        %205 = sbr.rel (%p203) target = $region20
      $region19: #{_autobackend_forward.1} parent=11 // pred_region
        _
      $region20: #{_autobackend_forward.1} parent=11 // pred_fallthru
        _
      // Predicated region
      $region21: #{_autobackend_forward.1} parent=11 // pred_check
        %p206 = pneg %p115
      $region22: #{_autobackend_forward.1} parent=11 // pred_check_branch
        %208 = sbr.rel (%p206) target = $region24
      $region23: #{_autobackend_forward.1} parent=11 // pred_region
        _
      $region24: #{_autobackend_forward.1} parent=11 // pred_fallthru
        _
      // Predicated region
      $region25: #{_autobackend_forward.1} parent=11 // pred_check
        %p209 = pneg %p136
      $region26: #{_autobackend_forward.1} parent=11 // pred_check_branch
        %211 = sbr.rel (%p209) target = $region28
      $region27: #{_autobackend_forward.1} parent=11 // pred_region
        _
      $region28: #{_autobackend_forward.1} parent=11 // pred_fallthru
        _
      // Predicated region
      $region29: #{_autobackend_forward.1} parent=11 // pred_check
        %p212 = pneg %p157
      $region30: #{_autobackend_forward.1} parent=11 // pred_check_branch
        %214 = sbr.rel (%p212) target = $region32
      $region31: #{_autobackend_forward.1} parent=11 // pred_region
        _
      $region32: #{_autobackend_forward.1} parent=11 // pred_fallthru
        _
    $region12: #{_autobackend_forward.1} parent=5 // pred_fallthru
      _
    %p215 = scmp.lt.s32.totalorder %s12, 2
    // Predicated region
    $region33: #{_autobackend_forward.1} parent=5 // pred_check
      %p216 = pneg %p215
    $region34: #{_autobackend_forward.1} parent=5 // pred_check_branch
      %218 = sbr.rel (%p216) target = $region36
    $region35: #{_autobackend_forward.1} parent=5 // pred_region
      // Predicated region
      $region37: #{_autobackend_forward.1} parent=35 // pred_check
        %p219 = pneg %p46
      $region38: #{_autobackend_forward.1} parent=35 // pred_check_branch
        %221 = sbr.rel (%p219) target = $region40
      $region39: #{_autobackend_forward.1} parent=35 // pred_region
        %p222 = scmp.lt.s32.totalorder %s19, 1
        %s223 = scalar_select %p222, %s19, 1
        %p224 = scmp.lt.s32.totalorder %s20, 0
        %s225 = scalar_select %p224, %s20, 0
        %s226 = smul.addr %s225, 13
        %s227 = smul.addr %s223, 13
        %s228 = sadd.s32 %s226, %s227
        %s229 = smul.addr %s228, 4
        %s230 = scalar_lea.vmem %s0, %s229
      $region40: #{_autobackend_forward.1} parent=35 // pred_fallthru
        _
    $region36: #{_autobackend_forward.1} parent=5 // pred_fallthru
      _
    %p231 = scmp.le.s32.totalorder 1, %s12
    %p232 = scmp.lt.s32.totalorder %s12, 3
    %p233 = pnand %p231, %p232
    %p234 = pneg %p233
    // Predicated region
    $region41: #{_autobackend_forward.1} parent=5 // pred_check
      _
    $region42: #{_autobackend_forward.1} parent=5 // pred_check_branch
      %236 = sbr.rel (%p233) target = $region44
    $region43: #{_autobackend_forward.1} parent=5 // pred_region
      %s237 = ssub.s32 %s12, 1
      %p238 = scmp.lt.s32.totalorder %s21, 1
      %s239 = scalar_select %p238, %s21, 1
      %p240 = scmp.lt.s32.totalorder %s22, 0
      %s241 = scalar_select %p240, %s22, 0
      %s242 = smul.addr %s241, 13
      %s243 = smul.addr %s239, 13
      %s244 = sadd.s32 %s242, %s243
      %s245 = smul.addr %s244, 4
      %s246 = scalar_lea.vmem %s0, %s245
      %p247 = pneg %p52
      %p248 = pneg %p49
      %p249 = pneg %p73
      %p250 = pneg %p70
      %p251 = pneg %p94
      %p252 = pneg %p91
      %p253 = pneg %p115
      %p254 = pneg %p112
      %p255 = pneg %p136
      %p256 = pneg %p133
      %p257 = pneg %p157
      %p258 = pneg %p154
      %p259 = pneg %p185
      %p260 = pneg %p182
      %p261 = scmp.lt.s32.totalorder %s21, 1
      %s262 = scalar_select %p261, %s21, 1
      %p263 = scmp.lt.s32.totalorder %s22, 0
      %s264 = scalar_select %p263, %s22, 0
      %s265 = smul.addr %s264, 4
      %s266 = smul.addr %s262, 4
      %s267 = sadd.s32 %s265, %s266
      %s268 = smul.addr %s267, 4
      %s269 = scalar_lea.vmem %s6, %s268
      %p270 = scmp.lt.s32.totalorder %s21, 1
      %s271 = scalar_select %p270, %s21, 1
      %p272 = scmp.lt.s32.totalorder %s22, 0
      %s273 = scalar_select %p272, %s22, 0
      %s274 = smul.addr %s273, 13
      %s275 = smul.addr %s271, 13
      %s276 = sadd.s32 %s274, %s275
      %s277 = smul.addr %s276, 4
      %s278 = scalar_lea.vmem %s0, %s277
      %p279 = scmp.lt.s32.totalorder %s21, 1
      %s280 = scalar_select %p279, %s21, 1
      %p281 = scmp.lt.s32.totalorder %s22, 0
      %s282 = scalar_select %p281, %s22, 0
      %s283 = smul.addr %s282, 4
      %s284 = smul.addr %s280, 4
      %s285 = sadd.s32 %s283, %s284
      %s286 = smul.addr %s285, 4
      %s287 = scalar_lea.vmem %s6, %s286
      %s289 = smul.u32 %s22, 4
      %v290 = vld [vmem:[%s5] sm:$0x1]
      %v291 = vld [vmem:[%s5 + $0x1] sm:$0x1]
      %v292 = vld [vmem:[%s5 + $0x2] sm:$0x1]
      %v293 = vld [vmem:[%s5 + $0x3] sm:$0x1]
      %v294 = vlaneseq
      %v295 = vshrl.u32 %v294, 7
      %v296 = vlaneseq
      %v297 = vand.u32 %v296, 127
      %v298 = vmul.u32 %v295, 2
      %v299 = vsub.s32 %v298, 3
      %vm300 = vcmp.ge.s32.totalorder %v297, 8
      %v301 = vsel %vm300, 1, 0
      %v302 = vadd.s32 %v299, %v301
      %vm303 = vcmp.ge.s32.totalorder %v302, 0
      %vm304 = vcmp.lt.s32.totalorder %v302, 8
      %vm305 = vmand %vm303, %vm304
      %v306 = vsel %vm305, 1, 0
      %v307 = vcvt.s32.f32 %v306
      %vm308 = vcmp.ge.s32.totalorder %v295, 1
      %vm309 = vcmp.le.s32.totalorder %v295, 4
      %vm310 = vmand %vm308, %vm309
      %v311 = vsel %vm310, 1, 0
      %v312 = vcvt.s32.f32 %v311
      loop: start=0, step=1, limit=13
      $region45: #{_autobackend_forward.1} parent=43 // loop_pre_header
        _
      $region46: #{_autobackend_forward.1} parent=43 // loop_header
        %s314 = sphi 0, %s318
        %p315 = scmp.ge.s32.totalorder %s314, 13
      $region47: #{_autobackend_forward.1} parent=43 // loop_header_branch
        %317 = sbr.rel (%p315) target = $region51
      $region48: #{_autobackend_forward.1} parent=43 // loop_body
        %s319 = smul.u32 %s22, 8
        %s320 = ssub.s32 %s319, 3
        %s321 = sadd.s32 %s320, %s314
        %p322 = scmp.ge.s32.totalorder %s321, 0
        %p323 = scmp.lt.s32.totalorder %s321, 8
        %p324 = pnand %p322, %p323
        %p325 = pneg %p324
        %s326 = scalar_select %p325, 1, 0
        %s327 = scvt.s32.f32 %s326
        %s328 = smul.addr %s314, 4
        %s329 = scalar_lea.vmem %s278, %s328
        %v330 = vld [vmem:[%s329] sm:$0xf]
        %v331 = vld [vmem:[%s1] sm:$0xf]
        %v332 = vld [vmem:[%s1 + $0x4] sm:$0xf]
        %v333 = vld [vmem:[%s1 + $0x8] sm:$0xf]
        %v334 = vld [vmem:[%s1 + $0xc] sm:$0xf]
        %v335 = vld [vmem:[%s1 + $0x10] sm:$0xf]
        %v336 = vld [vmem:[%s1 + $0x14] sm:$0xf]
        %v337 = vld [vmem:[%s1 + $0x18] sm:$0xf]
        %v338 = vld [vmem:[%s1 + $0x1c] sm:$0xf]
        %v339 = vlaneseq
        %v340 = vshrl.u32 %v339, 7
        %v341 = vsub.s32 0, %v340
        %v342 = vrot.slane %v290, %v341
        %v351 = vunpack.c.l.b16 %v331
        %v352 = vunpack.c.l.b16 %v332
        %v353 = vunpack.c.l.b16 %v333
        %v354 = vunpack.c.l.b16 %v334
        %v355 = vunpack.c.l.b16 %v335
        %v356 = vunpack.c.l.b16 %v336
        %v357 = vunpack.c.l.b16 %v337
        %v358 = vunpack.c.l.b16 %v338
        %v359 = vpack.c.b16 %v352, %v351
        %v360 = vpack.c.b16 %v354, %v353
        %v361 = vpack.c.b16 %v356, %v355
        %v362 = vpack.c.b16 %v358, %v357
        %vm367 = vcmask 523264
        %v369 = vsel %vm367, %v330, 0
        %371 = vmatprep.subr.bf16.mxu0 0
        %372 = vmatpush1.bf16.msra.mxu0 0
        %373 = vmatprep.subr.bf16.mxu0 0
        %374 = vmatpush1.bf16.msra.mxu0 0
        %375 = vmatprep.subr.bf16.mxu0 0
        %376 = vmatpush1.bf16.msra.mxu0 0
        %377 = vmatprep.subr.bf16.mxu0 0
        %378 = vmatpush1.bf16.msra.mxu0 0
        %379 = vmatprep.subr.bf16.mxu0 0
        %380 = vmatpush1.bf16.msra.mxu0 %v362
        %381 = vmatprep.subr.bf16.mxu0 0
        %382 = vmatpush1.bf16.msra.mxu0 %v361
        %383 = vmatprep.subr.bf16.mxu0 0
        %384 = vmatpush1.bf16.msra.mxu0 %v360
        %385 = vmatprep.subr.bf16.mxu0 0
        %386 = vmatpush1.bf16.msra.mxu0 %v359
        %387 = vmatprep.subr.bf16.mxu0 0
        %388 = vmatpush2.bf16.msra.mxu0 0
        %389 = vmatprep.subr.bf16.mxu0 0
        %390 = vmatpush2.bf16.msra.mxu0 0
        %391 = vmatprep.subr.bf16.mxu0 0
        %392 = vmatpush2.bf16.msra.mxu0 0
        %393 = vmatprep.subr.bf16.mxu0 0
        %394 = vmatpush2.bf16.msra.mxu0 0
        %395 = vmatprep.subr.bf16.mxu0 0
        %396 = vmatpush2.bf16.msra.mxu0 0
        %397 = vmatprep.subr.bf16.mxu0 0
        %398 = vmatpush2.bf16.msra.mxu0 0
        %399 = vmatprep.subr.bf16.mxu0 0
        %400 = vmatpush2.bf16.msra.mxu0 0
        %401 = vmatprep.subr.bf16.mxu0 0
        %402 = vmatpush2.bf16.msra.mxu0 0
        %403 = vmatprep.mubr.bf16.mxu0 0
        %404 = vmatmul.mubr.bf16.gmra.mxu0 %v369
        %v405 = vpop.f32.mrf.mxu0
        %v406 = vadd.f32 %v342, %v405
        %v407 = vpop.f32.mrf.mxu0
        %v408 = vpop.f32.mrf.mxu0
        %v409 = vpop.f32.mrf.mxu0
        %410 = vdwg.mxu0
        %v411 = vsub.f32 0.0, %v406
        %v412 = vmul.f32 %v411, 1.442695
        %v413 = vpow.pop %v412
        %v414 = vadd.f32 %v413, 1.0
        %v415 = vrcp.pop %v414
        %v416 = vmul.f32 %v406, %v415
        %v417 = vstv %s327
        %v418 = vmul.f32 %v307, %v417
        %v419 = vmul.f32 %v416, %v418
        %v420 = vpack.c.bf16 %v419, %v419
        %s421 = smul.addr %s314, 4
        %s422 = scalar_lea.vmem [#allocation2], %s421
        %vm423 = vcmask 125952
        %vm424 = vsmask.f32 3328
        %vm425 = vmand %vm423, %vm424
        %v426 = vld [vmem:[%s422] sm:$0xf]
        %v427 = vsel %vm425, %v420, %v426
        %428 = vst [vmem:[%s422] sm:$0xf] %v427
      $region49: #{_autobackend_forward.1} parent=43 // loop_footer
        %s318 = sadd.s32 1, %s314
      $region50: #{_autobackend_forward.1} parent=43 // loop_footer_branch
        %313 = sbr.rel target = $region46
      $region51: #{_autobackend_forward.1} parent=43 // loop_exit
        _
      loop: start=0, step=1, limit=6
      $region52: #{_autobackend_forward.1} parent=43 // loop_pre_header
        _
      $region53: #{_autobackend_forward.1} parent=43 // loop_header
        %s430 = sphi 0, %s434
        %p431 = scmp.ge.s32.totalorder %s430, 6
      $region54: #{_autobackend_forward.1} parent=43 // loop_header_branch
        %433 = sbr.rel (%p431) target = $region58
      $region55: #{_autobackend_forward.1} parent=43 // loop_body
        %s435 = ssub.s32 %s289, 1
        %s436 = sadd.s32 %s435, %s430
        %p437 = scmp.ge.s32.totalorder %s436, 0
        %p438 = scmp.lt.s32.totalorder %s436, 4
        %p439 = pnand %p437, %p438
        %p440 = pneg %p439
        %s441 = scalar_select %p440, 1, 0
        %s442 = scvt.s32.f32 %s441
        %s443 = smul.u32 %s430, 2
        %s444 = smul.addr %s443, 4
        %s445 = scalar_lea.vmem [#allocation2], %s444
        %v446 = vld [vmem:[%s445] sm:$0xf]
        %s447 = sadd.s32 %s443, 1
        %s448 = smul.addr %s447, 4
        %s449 = scalar_lea.vmem [#allocation2], %s448
        %v450 = vld [vmem:[%s449] sm:$0xf]
        %s451 = sadd.s32 %s443, 2
        %s452 = smul.addr %s451, 4
        %s453 = scalar_lea.vmem [#allocation2], %s452
        %v454 = vld [vmem:[%s453] sm:$0xf]
        %v456 = vunpack.c.l.b16 %v446
        %v457 = vpack.c.b16 %v456, %v456
        %v459 = vshrl.u32 %v457, 16
        %v461 = vshll.u32 %v457, 16
        %v463 = vrot.slane %v461, 1
        %v464 = vor.u32 %v459, %v463
        %465 = vrot.lane.b32.xlu0 %v464, 16
        %v466 = vpop.permute.xlu0 %465
        %v468 = vunpack.c.l.b16 %v450
        %v469 = vpack.c.b16 %v468, %v468
        %470 = vrot.lane.b32.xlu0 %v469, 24
        %v471 = vpop.permute.xlu0 %470
        %v473 = vshrl.u32 %v469, 16
        %v475 = vshll.u32 %v469, 16
        %v477 = vrot.slane %v475, 1
        %v478 = vor.u32 %v473, %v477
        %479 = vrot.lane.b32.xlu0 %v478, 40
        %v480 = vpop.permute.xlu0 %479
        %v482 = vunpack.c.l.b16 %v454
        %v483 = vpack.c.b16 %v482, %v482
        %484 = vrot.lane.b32.xlu0 %v483, 48
        %v485 = vpop.permute.xlu0 %484
        %v487 = vshrl.u32 %v483, 16
        %v489 = vshll.u32 %v483, 16
        %v491 = vrot.slane %v489, 1
        %v492 = vor.u32 %v487, %v491
        %493 = vrot.lane.b32.xlu0 %v492, 64
        %v494 = vpop.permute.xlu0 %493
        %vm495 = vcmask 130048
        %v498 = vsel %vm495, %v446, %v466
        %vm499 = vcmask 195584
        %v501 = vsel %vm499, %v498, %v471
        %vm502 = vcmask 326656
        %v504 = vsel %vm502, %v501, %v480
        %vm505 = vcmask 392192
        %v507 = vsel %vm505, %v504, %v485
        %vm508 = vcmask 523264
        %v510 = vsel %vm508, %v507, %v494
        %v511 = vld [vmem:[%s2] sm:$0xf]
        %v512 = vld [vmem:[%s2 + $0x4] sm:$0xf]
        %v513 = vld [vmem:[%s2 + $0x8] sm:$0xf]
        %v514 = vld [vmem:[%s2 + $0xc] sm:$0xf]
        %v515 = vld [vmem:[%s2 + $0x10] sm:$0xf]
        %v516 = vld [vmem:[%s2 + $0x14] sm:$0xf]
        %v517 = vld [vmem:[%s2 + $0x18] sm:$0xf]
        %v518 = vld [vmem:[%s2 + $0x1c] sm:$0xf]
        %v519 = vld [vmem:[%s2 + $0x20] sm:$0xf]
        %v520 = vlaneseq
        %v521 = vshrl.u32 %v520, 7
        %v522 = vsub.s32 0, %v521
        %v523 = vrot.slane %v291, %v522
        %v533 = vunpack.c.l.b16 %v511
        %v534 = vunpack.c.l.b16 %v512
        %v535 = vunpack.c.l.b16 %v513
        %v536 = vunpack.c.l.b16 %v514
        %v537 = vunpack.c.l.b16 %v515
        %v538 = vunpack.c.l.b16 %v516
        %v539 = vunpack.c.l.b16 %v517
        %v540 = vunpack.c.l.b16 %v518
        %v541 = vunpack.c.l.b16 %v519
        %v542 = vpack.c.b16 %v534, %v533
        %v543 = vpack.c.b16 %v536, %v535
        %v544 = vpack.c.b16 %v538, %v537
        %v545 = vpack.c.b16 %v540, %v539
        %v546 = vpack.c.b16 %v541, %v541
        %vm551 = vcmask 588800
        %v552 = vsel %vm551, %v510, 0
        %vm554 = vcmask 1043456
        %v556 = vsel %vm554, %v546, 0
        %558 = vmatprep.subr.bf16.mxu0 0
        %559 = vmatpush1.bf16.msra.mxu0 0
        %560 = vmatprep.subr.bf16.mxu0 0
        %561 = vmatpush1.bf16.msra.mxu0 0
        %562 = vmatprep.subr.bf16.mxu0 0
        %563 = vmatpush1.bf16.msra.mxu0 0
        %564 = vmatprep.subr.bf16.mxu0 0
        %565 = vmatpush1.bf16.msra.mxu0 %v556
        %566 = vmatprep.subr.bf16.mxu0 0
        %567 = vmatpush1.bf16.msra.mxu0 %v545
        %568 = vmatprep.subr.bf16.mxu0 0
        %569 = vmatpush1.bf16.msra.mxu0 %v544
        %570 = vmatprep.subr.bf16.mxu0 0
        %571 = vmatpush1.bf16.msra.mxu0 %v543
        %572 = vmatprep.subr.bf16.mxu0 0
        %573 = vmatpush1.bf16.msra.mxu0 %v542
        %574 = vmatprep.subr.bf16.mxu0 0
        %575 = vmatpush2.bf16.msra.mxu0 0
        %576 = vmatprep.subr.bf16.mxu0 0
        %577 = vmatpush2.bf16.msra.mxu0 0
        %578 = vmatprep.subr.bf16.mxu0 0
        %579 = vmatpush2.bf16.msra.mxu0 0
        %580 = vmatprep.subr.bf16.mxu0 0
        %581 = vmatpush2.bf16.msra.mxu0 0
        %582 = vmatprep.subr.bf16.mxu0 0
        %583 = vmatpush2.bf16.msra.mxu0 0
        %584 = vmatprep.subr.bf16.mxu0 0
        %585 = vmatpush2.bf16.msra.mxu0 0
        %586 = vmatprep.subr.bf16.mxu0 0
        %587 = vmatpush2.bf16.msra.mxu0 0
        %588 = vmatprep.subr.bf16.mxu0 0
        %589 = vmatpush2.bf16.msra.mxu0 0
        %590 = vmatprep.mubr.bf16.mxu0 0
        %591 = vmatmul.mubr.bf16.gmra.mxu0 %v552
        %v592 = vpop.f32.mrf.mxu0
        %v593 = vadd.f32 %v523, %v592
        %v594 = vpop.f32.mrf.mxu0
        %v595 = vpop.f32.mrf.mxu0
        %v596 = vpop.f32.mrf.mxu0
        %597 = vdwg.mxu0
        %v598 = vsub.f32 0.0, %v593
        %v599 = vmul.f32 %v598, 1.442695
        %v600 = vpow.pop %v599
        %v601 = vadd.f32 %v600, 1.0
        %v602 = vrcp.pop %v601
        %v603 = vmul.f32 %v593, %v602
        %v604 = vstv %s442
        %v605 = vmul.f32 %v312, %v604
        %v606 = vmul.f32 %v603, %v605
        %v607 = vpack.c.bf16 %v606, %v606
        %s608 = smul.addr %s430, 4
        %s609 = scalar_lea.vmem [#allocation3], %s608
        %vm610 = vcmask 124928
        %611 = vst.msk [vmem:[%s609] sm:$0x7] %vm610, %v607
      $region56: #{_autobackend_forward.1} parent=43 // loop_footer
        %s434 = sadd.s32 1, %s430
      $region57: #{_autobackend_forward.1} parent=43 // loop_footer_branch
        %429 = sbr.rel target = $region53
      $region58: #{_autobackend_forward.1} parent=43 // loop_exit
        _
      loop: start=0, step=1, limit=4
      $region59: #{_autobackend_forward.1} parent=43 // loop_pre_header
        _
      $region60: #{_autobackend_forward.1} parent=43 // loop_header
        %s613 = sphi 0, %s617
        %p614 = scmp.ge.s32.totalorder %s613, 4
      $region61: #{_autobackend_forward.1} parent=43 // loop_header_branch
        %616 = sbr.rel (%p614) target = $region65
      $region62: #{_autobackend_forward.1} parent=43 // loop_body
        %s618 = smul.addr %s613, 4
        %s619 = scalar_lea.vmem [#allocation3], %s618
        %v620 = vld [vmem:[%s619] sm:$0x7]
        %v622 = vunpack.c.l.b16 %v620
        %v623 = vpack.c.b16 %v622, %v622
        %v625 = vshrl.u32 %v623, 16
        %v627 = vshll.u32 %v623, 16
        %v629 = vrot.slane %v627, 1
        %v630 = vor.u32 %v625, %v629
        %631 = vrot.lane.b32.xlu0 %v630, 16
        %v632 = vpop.permute.xlu0 %631
        %v633 = vrot.slane %v623, 1
        %634 = vrot.lane.b32.xlu0 %v633, 32
        %v635 = vpop.permute.xlu0 %634
        %vm636 = vcmask 130048
        %v639 = vsel %vm636, %v620, %v632
        %vm640 = vcmask 261120
        %v642 = vsel %vm640, %v639, %v635
        %v643 = vld [vmem:[%s3] sm:$0xf]
        %v644 = vld [vmem:[%s3 + $0x4] sm:$0xf]
        %v645 = vld [vmem:[%s3 + $0x8] sm:$0xf]
        %v646 = vld [vmem:[%s3 + $0xc] sm:$0xf]
        %v647 = vld [vmem:[%s3 + $0x10] sm:$0xf]
        %v648 = vld [vmem:[%s3 + $0x14] sm:$0xf]
        %s649 = sadd.s32 %s613, 1
        %s650 = smul.addr %s649, 4
        %s651 = scalar_lea.vmem [#allocation3], %s650
        %v652 = vld [vmem:[%s651] sm:$0x7]
        %v654 = vunpack.c.l.b16 %v652
        %v655 = vpack.c.b16 %v654, %v654
        %v657 = vshrl.u32 %v655, 16
        %v659 = vshll.u32 %v655, 16
        %v661 = vrot.slane %v659, 1
        %v662 = vor.u32 %v657, %v661
        %663 = vrot.lane.b32.xlu0 %v662, 16
        %v664 = vpop.permute.xlu0 %663
        %v665 = vrot.slane %v655, 1
        %666 = vrot.lane.b32.xlu0 %v665, 32
        %v667 = vpop.permute.xlu0 %666
        %v670 = vsel %vm636, %v652, %v664
        %v672 = vsel %vm640, %v670, %v667
        %s673 = scalar_lea.vmem %s3, 24
        %v674 = vld [vmem:[%s673] sm:$0xf]
        %v675 = vld [vmem:[%s673 + $0x4] sm:$0xf]
        %v676 = vld [vmem:[%s673 + $0x8] sm:$0xf]
        %v677 = vld [vmem:[%s673 + $0xc] sm:$0xf]
        %v678 = vld [vmem:[%s673 + $0x10] sm:$0xf]
        %v679 = vld [vmem:[%s673 + $0x14] sm:$0xf]
        %v686 = vunpack.c.l.b16 %v674
        %v687 = vunpack.c.l.b16 %v675
        %v688 = vunpack.c.l.b16 %v676
        %v689 = vunpack.c.l.b16 %v677
        %v690 = vunpack.c.l.b16 %v678
        %v691 = vunpack.c.l.b16 %v679
        %v692 = vpack.c.b16 %v687, %v686
        %v693 = vpack.c.b16 %v689, %v688
        %v694 = vpack.c.b16 %v691, %v690
        %vm698 = vcmask 392192
        %v699 = vsel %vm698, %v672, 0
        %701 = vmatprep.subr.bf16.mxu0 0
        %702 = vmatpush1.bf16.msra.mxu0 0
        %703 = vmatprep.subr.bf16.mxu0 0
        %704 = vmatpush1.bf16.msra.mxu0 0
        %705 = vmatprep.subr.bf16.mxu0 0
        %706 = vmatpush1.bf16.msra.mxu0 0
        %707 = vmatprep.subr.bf16.mxu0 0
        %708 = vmatpush1.bf16.msra.mxu0 0
        %709 = vmatprep.subr.bf16.mxu0 0
        %710 = vmatpush1.bf16.msra.mxu0 0
        %711 = vmatprep.subr.bf16.mxu0 0
        %712 = vmatpush1.bf16.msra.mxu0 %v694
        %713 = vmatprep.subr.bf16.mxu0 0
        %714 = vmatpush1.bf16.msra.mxu0 %v693
        %715 = vmatprep.subr.bf16.mxu0 0
        %716 = vmatpush1.bf16.msra.mxu0 %v692
        %717 = vmatprep.subr.bf16.mxu0 0
        %718 = vmatpush2.bf16.msra.mxu0 0
        %719 = vmatprep.subr.bf16.mxu0 0
        %720 = vmatpush2.bf16.msra.mxu0 0
        %721 = vmatprep.subr.bf16.mxu0 0
        %722 = vmatpush2.bf16.msra.mxu0 0
        %723 = vmatprep.subr.bf16.mxu0 0
        %724 = vmatpush2.bf16.msra.mxu0 0
        %725 = vmatprep.subr.bf16.mxu0 0
        %726 = vmatpush2.bf16.msra.mxu0 0
        %727 = vmatprep.subr.bf16.mxu0 0
        %728 = vmatpush2.bf16.msra.mxu0 0
        %729 = vmatprep.subr.bf16.mxu0 0
        %730 = vmatpush2.bf16.msra.mxu0 0
        %731 = vmatprep.subr.bf16.mxu0 0
        %732 = vmatpush2.bf16.msra.mxu0 0
        %733 = vmatprep.mubr.bf16.mxu0 0
        %734 = vmatmul.mubr.bf16.gmra.mxu0 %v699
        %v735 = vpop.f32.mrf.mxu0
        %v736 = vadd.f32 0.0, %v735
        %v737 = vpop.f32.mrf.mxu0
        %v738 = vpop.f32.mrf.mxu0
        %v739 = vpop.f32.mrf.mxu0
        %740 = vdwg.mxu0
        %v747 = vunpack.c.l.b16 %v643
        %v748 = vunpack.c.l.b16 %v644
        %v749 = vunpack.c.l.b16 %v645
        %v750 = vunpack.c.l.b16 %v646
        %v751 = vunpack.c.l.b16 %v647
        %v752 = vunpack.c.l.b16 %v648
        %v753 = vpack.c.b16 %v748, %v747
        %v754 = vpack.c.b16 %v750, %v749
        %v755 = vpack.c.b16 %v752, %v751
        %v759 = vsel %vm698, %v642, 0
        %761 = vmatprep.subr.bf16.mxu0 0
        %762 = vmatpush1.bf16.msra.mxu0 0
        %763 = vmatprep.subr.bf16.mxu0 0
        %764 = vmatpush1.bf16.msra.mxu0 0
        %765 = vmatprep.subr.bf16.mxu0 0
        %766 = vmatpush1.bf16.msra.mxu0 0
        %767 = vmatprep.subr.bf16.mxu0 0
        %768 = vmatpush1.bf16.msra.mxu0 0
        %769 = vmatprep.subr.bf16.mxu0 0
        %770 = vmatpush1.bf16.msra.mxu0 0
        %771 = vmatprep.subr.bf16.mxu0 0
        %772 = vmatpush1.bf16.msra.mxu0 %v755
        %773 = vmatprep.subr.bf16.mxu0 0
        %774 = vmatpush1.bf16.msra.mxu0 %v754
        %775 = vmatprep.subr.bf16.mxu0 0
        %776 = vmatpush1.bf16.msra.mxu0 %v753
        %777 = vmatprep.subr.bf16.mxu0 0
        %778 = vmatpush2.bf16.msra.mxu0 0
        %779 = vmatprep.subr.bf16.mxu0 0
        %780 = vmatpush2.bf16.msra.mxu0 0
        %781 = vmatprep.subr.bf16.mxu0 0
        %782 = vmatpush2.bf16.msra.mxu0 0
        %783 = vmatprep.subr.bf16.mxu0 0
        %784 = vmatpush2.bf16.msra.mxu0 0
        %785 = vmatprep.subr.bf16.mxu0 0
        %786 = vmatpush2.bf16.msra.mxu0 0
        %787 = vmatprep.subr.bf16.mxu0 0
        %788 = vmatpush2.bf16.msra.mxu0 0
        %789 = vmatprep.subr.bf16.mxu0 0
        %790 = vmatpush2.bf16.msra.mxu0 0
        %791 = vmatprep.subr.bf16.mxu0 0
        %792 = vmatpush2.bf16.msra.mxu0 0
        %793 = vmatprep.mubr.bf16.mxu0 0
        %794 = vmatmul.mubr.bf16.gmra.mxu0 %v759
        %v795 = vpop.f32.mrf.mxu0
        %v796 = vadd.f32 %v736, %v795
        %v797 = vpop.f32.mrf.mxu0
        %v798 = vpop.f32.mrf.mxu0
        %v799 = vpop.f32.mrf.mxu0
        %800 = vdwg.mxu0
        %s801 = sadd.s32 %s613, 2
        %s802 = smul.addr %s801, 4
        %s803 = scalar_lea.vmem [#allocation3], %s802
        %v804 = vld [vmem:[%s803] sm:$0x7]
        %v806 = vunpack.c.l.b16 %v804
        %v807 = vpack.c.b16 %v806, %v806
        %v809 = vshrl.u32 %v807, 16
        %v811 = vshll.u32 %v807, 16
        %v813 = vrot.slane %v811, 1
        %v814 = vor.u32 %v809, %v813
        %815 = vrot.lane.b32.xlu0 %v814, 16
        %v816 = vpop.permute.xlu0 %815
        %v817 = vrot.slane %v807, 1
        %818 = vrot.lane.b32.xlu0 %v817, 32
        %v819 = vpop.permute.xlu0 %818
        %v822 = vsel %vm636, %v804, %v816
        %v824 = vsel %vm640, %v822, %v819
        %s825 = scalar_lea.vmem %s3, 48
        %v826 = vld [vmem:[%s825] sm:$0xf]
        %v827 = vld [vmem:[%s825 + $0x4] sm:$0xf]
        %v828 = vld [vmem:[%s825 + $0x8] sm:$0xf]
        %v829 = vld [vmem:[%s825 + $0xc] sm:$0xf]
        %v830 = vld [vmem:[%s825 + $0x10] sm:$0xf]
        %v831 = vld [vmem:[%s825 + $0x14] sm:$0xf]
        %v838 = vunpack.c.l.b16 %v826
        %v839 = vunpack.c.l.b16 %v827
        %v840 = vunpack.c.l.b16 %v828
        %v841 = vunpack.c.l.b16 %v829
        %v842 = vunpack.c.l.b16 %v830
        %v843 = vunpack.c.l.b16 %v831
        %v844 = vpack.c.b16 %v839, %v838
        %v845 = vpack.c.b16 %v841, %v840
        %v846 = vpack.c.b16 %v843, %v842
        %v850 = vsel %vm698, %v824, 0
        %852 = vmatprep.subr.bf16.mxu0 0
        %853 = vmatpush1.bf16.msra.mxu0 0
        %854 = vmatprep.subr.bf16.mxu0 0
        %855 = vmatpush1.bf16.msra.mxu0 0
        %856 = vmatprep.subr.bf16.mxu0 0
        %857 = vmatpush1.bf16.msra.mxu0 0
        %858 = vmatprep.subr.bf16.mxu0 0
        %859 = vmatpush1.bf16.msra.mxu0 0
        %860 = vmatprep.subr.bf16.mxu0 0
        %861 = vmatpush1.bf16.msra.mxu0 0
        %862 = vmatprep.subr.bf16.mxu0 0
        %863 = vmatpush1.bf16.msra.mxu0 %v846
        %864 = vmatprep.subr.bf16.mxu0 0
        %865 = vmatpush1.bf16.msra.mxu0 %v845
        %866 = vmatprep.subr.bf16.mxu0 0
        %867 = vmatpush1.bf16.msra.mxu0 %v844
        %868 = vmatprep.subr.bf16.mxu0 0
        %869 = vmatpush2.bf16.msra.mxu0 0
        %870 = vmatprep.subr.bf16.mxu0 0
        %871 = vmatpush2.bf16.msra.mxu0 0
        %872 = vmatprep.subr.bf16.mxu0 0
        %873 = vmatpush2.bf16.msra.mxu0 0
        %874 = vmatprep.subr.bf16.mxu0 0
        %875 = vmatpush2.bf16.msra.mxu0 0
        %876 = vmatprep.subr.bf16.mxu0 0
        %877 = vmatpush2.bf16.msra.mxu0 0
        %878 = vmatprep.subr.bf16.mxu0 0
        %879 = vmatpush2.bf16.msra.mxu0 0
        %880 = vmatprep.subr.bf16.mxu0 0
        %881 = vmatpush2.bf16.msra.mxu0 0
        %882 = vmatprep.subr.bf16.mxu0 0
        %883 = vmatpush2.bf16.msra.mxu0 0
        %884 = vmatprep.mubr.bf16.mxu0 0
        %885 = vmatmul.mubr.bf16.gmra.mxu0 %v850
        %v886 = vpop.f32.mrf.mxu0
        %v887 = vadd.f32 0.0, %v886
        %v888 = vpop.f32.mrf.mxu0
        %v889 = vpop.f32.mrf.mxu0
        %v890 = vpop.f32.mrf.mxu0
        %891 = vdwg.mxu0
        %v892 = vadd.f32 %v796, %v887
        %v893 = vlaneseq
        %v894 = vshrl.u32 %v893, 7
        %v895 = vsub.s32 0, %v894
        %v896 = vrot.slane %v292, %v895
        %v897 = vadd.f32 %v892, %v896
        %v898 = vsub.f32 0.0, %v897
        %v899 = vmul.f32 %v898, 1.442695
        %v900 = vpow.pop %v899
        %v901 = vadd.f32 %v900, 1.0
        %v902 = vrcp.pop %v901
        %v903 = vmul.f32 %v897, %v902
        %v904 = vpack.c.bf16 %v903, %v903
        %v905 = vld [vmem:[%s4] sm:$0xf]
        %v906 = vld [vmem:[%s4 + $0x4] sm:$0xf]
        %v907 = vlaneseq
        %v908 = vshrl.u32 %v907, 7
        %v909 = vsub.s32 0, %v908
        %v910 = vrot.slane %v293, %v909
        %v913 = vunpack.c.l.b16 %v905
        %v914 = vunpack.c.l.b16 %v906
        %v915 = vpack.c.b16 %v914, %v913
        %v918 = vsel %vm636, %v904, 0
        %920 = vmatprep.subr.bf16.mxu0 0
        %921 = vmatpush1.bf16.msra.mxu0 0
        %922 = vmatprep.subr.bf16.mxu0 0
        %923 = vmatpush1.bf16.msra.mxu0 0
        %924 = vmatprep.subr.bf16.mxu0 0
        %925 = vmatpush1.bf16.msra.mxu0 0
        %926 = vmatprep.subr.bf16.mxu0 0
        %927 = vmatpush1.bf16.msra.mxu0 0
        %928 = vmatprep.subr.bf16.mxu0 0
        %929 = vmatpush1.bf16.msra.mxu0 0
        %930 = vmatprep.subr.bf16.mxu0 0
        %931 = vmatpush1.bf16.msra.mxu0 0
        %932 = vmatprep.subr.bf16.mxu0 0
        %933 = vmatpush1.bf16.msra.mxu0 0
        %934 = vmatprep.subr.bf16.mxu0 0
        %935 = vmatpush1.bf16.msra.mxu0 %v915
        %936 = vmatprep.subr.bf16.mxu0 0
        %937 = vmatpush2.bf16.msra.mxu0 0
        %938 = vmatprep.subr.bf16.mxu0 0
        %939 = vmatpush2.bf16.msra.mxu0 0
        %940 = vmatprep.subr.bf16.mxu0 0
        %941 = vmatpush2.bf16.msra.mxu0 0
        %942 = vmatprep.subr.bf16.mxu0 0
        %943 = vmatpush2.bf16.msra.mxu0 0
        %944 = vmatprep.subr.bf16.mxu0 0
        %945 = vmatpush2.bf16.msra.mxu0 0
        %946 = vmatprep.subr.bf16.mxu0 0
        %947 = vmatpush2.bf16.msra.mxu0 0
        %948 = vmatprep.subr.bf16.mxu0 0
        %949 = vmatpush2.bf16.msra.mxu0 0
        %950 = vmatprep.subr.bf16.mxu0 0
        %951 = vmatpush2.bf16.msra.mxu0 0
        %952 = vmatprep.mubr.bf16.mxu0 0
        %953 = vmatmul.mubr.bf16.gmra.mxu0 %v918
        %v954 = vpop.f32.mrf.mxu0
        %v955 = vadd.f32 %v910, %v954
        %v956 = vpop.f32.mrf.mxu0
        %v957 = vpop.f32.mrf.mxu0
        %v958 = vpop.f32.mrf.mxu0
        %959 = vdwg.mxu0
        %s960 = smul.u32 %s613, 4
        %s961 = scalar_lea.vmem %s287, %s960
        %vm962 = vcmask 257024
        %963 = vst.msk [vmem:[%s961] sm:$0xf] %vm962, %v955
      $region63: #{_autobackend_forward.1} parent=43 // loop_footer
        %s617 = sadd.s32 1, %s613
      $region64: #{_autobackend_forward.1} parent=43 // loop_footer_branch
        %612 = sbr.rel target = $region60
      $region65: #{_autobackend_forward.1} parent=43 // loop_exit
        _
      %p964 = scmp.lt.s32.totalorder %s21, 1
      %s965 = scalar_select %p964, %s21, 1
      %p966 = scmp.lt.s32.totalorder %s22, 0
      %s967 = scalar_select %p966, %s22, 0
      %s968 = smul.addr %s967, 4
      %s969 = smul.addr %s965, 4
      %s970 = sadd.s32 %s968, %s969
      %s971 = smul.addr %s970, 4
      %s972 = scalar_lea.vmem %s6, %s971
      // Predicated region
      $region66: #{_autobackend_forward.1} parent=43 // pred_check
        %p973 = pneg %p182
      $region67: #{_autobackend_forward.1} parent=43 // pred_check_branch
        %975 = sbr.rel (%p973) target = $region69
      $region68: #{_autobackend_forward.1} parent=43 // pred_region
        _
      $region69: #{_autobackend_forward.1} parent=43 // pred_fallthru
        _
    $region44: #{_autobackend_forward.1} parent=5 // pred_fallthru
      _
    %p976 = scmp.le.s32.totalorder 2, %s12
    // Predicated region
    $region70: #{_autobackend_forward.1} parent=5 // pred_check
      %p977 = pneg %p976
    $region71: #{_autobackend_forward.1} parent=5 // pred_check_branch
      %979 = sbr.rel (%p977) target = $region73
    $region72: #{_autobackend_forward.1} parent=5 // pred_region
      %s980 = ssub.s32 %s12, 2
      // Predicated region
      $region74: #{_autobackend_forward.1} parent=72 // pred_check
        %p981 = pneg %p188
      $region75: #{_autobackend_forward.1} parent=72 // pred_check_branch
        %983 = sbr.rel (%p981) target = $region77
      $region76: #{_autobackend_forward.1} parent=72 // pred_region
        %p984 = scmp.lt.s32.totalorder %s23, 1
        %s985 = scalar_select %p984, %s23, 1
        %p986 = scmp.lt.s32.totalorder %s24, 0
        %s987 = scalar_select %p986, %s24, 0
        %s988 = smul.addr %s987, 4
        %s989 = smul.addr %s985, 4
        %s990 = sadd.s32 %s988, %s989
        %s991 = smul.addr %s990, 4
        %s992 = scalar_lea.vmem %s6, %s991
      $region77: #{_autobackend_forward.1} parent=72 // pred_fallthru
        _
    $region73: #{_autobackend_forward.1} parent=5 // pred_fallthru
      _
  $region6: #{_autobackend_forward.1} parent=0 // loop_footer
    %s16 = sadd.s32 1, %s12
  $region7: #{_autobackend_forward.1} parent=0 // loop_footer_branch
    %11 = sbr.rel target = $region3
  $region8: #{_autobackend_forward.1} parent=0 // loop_exit
    _

</llo_original>
